<compile_context>
chip_gen: v7x
topology: tpu7x:2x2x1
jax: 0.10.0
libtpu: 0.0.40
codegen_flags: <defaults>
</compile_context>

<pallas_src>
import functools

import jax
import jax.numpy as jnp
from jax import lax
from jax.experimental import pallas as pl
from jax.experimental.pallas import tpu as pltpu


def _round_up(x, m):
    return ((x + m - 1) // m) * m


def _vmem_capacity_bytes():
    try:
        cap = int(pltpu.get_tpu_info().vmem_capacity_bytes)
        if cap > 0:
            return cap
    except Exception:
        pass
    return 64 << 20          # v7x per-TC capacity; safe default everywhere.


def _vmem_limit(nbytes, cap):
    # Headroom over the estimated working set, clamped to physical VMEM.
    return int(min(max(int(nbytes * 1.2) + (2 << 20), 16 << 20), cap))


# ---------------------------------------------------------------------------
# Single-pass streaming kernel (default path).
# ---------------------------------------------------------------------------
def _stream_kernel(x_ref, emb_ref, o_ref, m_sc, l_sc, *opt_slab,
                   v_total, v_padded, tv):
    # x_ref: (tm, D), emb_ref: (tv, D), o_ref: (tm, Vp) resident across vocab axis.
    # opt_slab (optional): (tm, Vp) f32 scratch, used when o_ref is not f32.
    j = pl.program_id(1)
    store = opt_slab[0] if opt_slab else o_ref

    @pl.when(j == 0)
    def _():
        m_sc[...] = jnp.full_like(m_sc, -jnp.inf)
        l_sc[...] = jnp.zeros_like(l_sc)

    logits = lax.dot_general(
        x_ref[...], emb_ref[...],
        dimension_numbers=(((1,), (1,)), ((), ())),   # contract d_model of both
        preferred_element_type=jnp.float32,
    )                                                  # (tm, tv) f32
    if v_padded != v_total:                            # mask vocab padding columns
        col = j * tv + lax.broadcasted_iota(jnp.int32, logits.shape, 1)
        logits = jnp.where(col < v_total, logits, -jnp.inf)

    start = pl.multiple_of(j * tv, tv)                 # lane-aligned slab slice
    store[:, pl.ds(start, tv)] = logits.astype(store.dtype)

    m_prev = m_sc[...]
    m_new = jnp.maximum(m_prev, jnp.max(logits, axis=-1, keepdims=True))
    l_sc[...] = l_sc[...] * jnp.exp(m_prev - m_new) + jnp.sum(
        jnp.exp(logits - m_new), axis=-1, keepdims=True)
    m_sc[...] = m_new

    @pl.when(j == pl.num_programs(1) - 1)
    def _():
        lse = m_sc[...] + jnp.log(l_sc[...])
        o_ref[...] = (store[...] - lse).astype(o_ref.dtype)


# ---------------------------------------------------------------------------
# Fallback pass 1: per vocab tile, emit raw f32 logits to HBM and accumulate
# an online (max, sum-exp) -> final log-sum-exp per row.
# ---------------------------------------------------------------------------
def _lse_kernel(x_ref, emb_ref, logits_ref, lse_ref, m_sc, l_sc,
                *, v_total, v_padded, tv):
    j = pl.program_id(1)

    @pl.when(j == 0)
    def _():
        m_sc[...] = jnp.full_like(m_sc, -jnp.inf)
        l_sc[...] = jnp.zeros_like(l_sc)

    logits = lax.dot_general(
        x_ref[...], emb_ref[...],
        dimension_numbers=(((1,), (1,)), ((), ())),
        preferred_element_type=jnp.float32,
    )
    if v_padded != v_total:
        col = j * tv + lax.broadcasted_iota(jnp.int32, logits.shape, 1)
        logits = jnp.where(col < v_total, logits, -jnp.inf)

    logits_ref[...] = logits

    m_prev = m_sc[...]
    m_new = jnp.maximum(m_prev, jnp.max(logits, axis=-1, keepdims=True))
    l_sc[...] = l_sc[...] * jnp.exp(m_prev - m_new) + jnp.sum(
        jnp.exp(logits - m_new), axis=-1, keepdims=True)
    m_sc[...] = m_new

    @pl.when(j == pl.num_programs(1) - 1)
    def _():
        lse_ref[...] = m_sc[...] + jnp.log(l_sc[...])


# ---------------------------------------------------------------------------
# Fallback pass 2: lane-dense elementwise normalization.
# ---------------------------------------------------------------------------
def _normalize_kernel(logits_ref, lse_ref, o_ref):
    o_ref[...] = (logits_ref[...] - lse_ref[...]).astype(o_ref.dtype)


def generator_forward(x, emb, *, tm_max=256, tv_max=1024, matmul_dtype=None,
                      force_two_pass=False):
    """log_softmax(x @ emb.T, axis=-1) with Pallas TPU kernels.

    x  : (..., d_model)
    emb: (vocab, d_model)
    matmul_dtype: optional low-precision dtype (e.g. jnp.bfloat16) for the MXU
                  inputs; softmax/LSE math and accumulation always stay f32.
    """
    *lead, d_model = x.shape
    vocab, d_model_e = emb.shape
    assert d_model == d_model_e
    out_dtype = x.dtype

    x2 = x.reshape(-1, d_model)
    M = x2.shape[0]

    if matmul_dtype is not None:
        x2 = x2.astype(matmul_dtype)
        emb_in = emb.astype(matmul_dtype)
    else:
        emb_in = emb

    x_item = jnp.dtype(x2.dtype).itemsize
    e_item = jnp.dtype(emb_in.dtype).itemsize
    o_item = jnp.dtype(out_dtype).itemsize

    cap = _vmem_capacity_bytes()
    budget = int(cap * 0.75)

    # Vocab (lane) tile: multiple of 128; shrink if the emb double-buffer alone
    # would eat the VMEM budget (very large d_model).
    tv = max(128, (min(tv_max, _round_up(vocab, 128)) // 128) * 128)
    tv_fit = (budget // 3) // max(2 * d_model * e_item, 1)
    tv_fit = max(128, (tv_fit // 128) * 128)
    tv = min(tv, tv_fit)
    Vp = _round_up(vocab, tv)
    num_v = Vp // tv
    emb_buf_bytes = 2 * tv * d_model * e_item

    # Row (sublane) tile for the single-pass path: largest multiple of 8
    # (<= tm_max) whose resident output slab + double buffers fit the budget.
    out_is_f32 = jnp.dtype(out_dtype) == jnp.dtype(jnp.float32)
    per_row = (2 * Vp * o_item                      # resident output block (x2 buffers)
               + (0 if out_is_f32 else Vp * 4)      # extra f32 slab for non-f32 outputs
               + 2 * d_model * x_item)              # x double-buffer
    tm_fit = (budget - emb_buf_bytes) // max(per_row, 1)
    tm_fit = (tm_fit // 8) * 8
    tm_cap = max(8, (min(tm_max, _round_up(M, 8)) // 8) * 8)
    use_single_pass = (not force_two_pass) and tm_fit >= 8

    if use_single_pass:
        # ---- Single-pass streaming path: no logits HBM round trip.
        tm = min(tm_cap, tm_fit)
        Mp = _round_up(M, tm)
        x_in = jnp.pad(x2, ((0, Mp - M), (0, 0))) if Mp != M else x2
        emb_p = jnp.pad(emb_in, ((0, Vp - vocab), (0, 0))) if Vp != vocab else emb_in
        num_m = Mp // tm

        scratch = [pltpu.VMEM((tm, 1), jnp.float32),    # running max
                   pltpu.VMEM((tm, 1), jnp.float32)]    # running sum-exp
        if not out_is_f32:
            scratch.append(pltpu.VMEM((tm, Vp), jnp.float32))   # f32 logits slab

        vmem = emb_buf_bytes + tm * per_row + 3 * tm * tv * 4
        kernel = functools.partial(_stream_kernel, v_total=vocab, v_padded=Vp, tv=tv)
        out = pl.pallas_call(
            kernel,
            out_shape=jax.ShapeDtypeStruct((Mp, Vp), out_dtype),
            grid_spec=pltpu.PrefetchScalarGridSpec(
                num_scalar_prefetch=0,
                grid=(num_m, num_v),                    # vocab (reduction) axis last
                in_specs=[
                    pl.BlockSpec((tm, d_model), lambda i, j: (i, 0)),
                    pl.BlockSpec((tv, d_model), lambda i, j: (j, 0)),
                ],
                out_specs=pl.BlockSpec((tm, Vp), lambda i, j: (i, 0)),
                scratch_shapes=scratch,
            ),
            compiler_params=pltpu.CompilerParams(
                dimension_semantics=("parallel", "arbitrary"),
                vmem_limit_bytes=_vmem_limit(vmem, cap),
            ),
        )(x_in, emb_p)
    else:
        # ---- Two-pass fallback (extreme vocab): logits tiles + LSE, then normalize.
        tm = tm_cap
        Mp = _round_up(M, tm)
        x_in = jnp.pad(x2, ((0, Mp - M), (0, 0))) if Mp != M else x2
        emb_p = jnp.pad(emb_in, ((0, Vp - vocab), (0, 0))) if Vp != vocab else emb_in
        num_m = Mp // tm

        vmem1 = (emb_buf_bytes + 2 * tm * d_model * x_item
                 + 2 * tm * tv * 4 + 8 * tm * 4)
        lse_kernel = functools.partial(_lse_kernel, v_total=vocab, v_padded=Vp, tv=tv)
        logits, lse = pl.pallas_call(
            lse_kernel,
            out_shape=(
                jax.ShapeDtypeStruct((Mp, Vp), jnp.float32),
                jax.ShapeDtypeStruct((Mp, 1), jnp.float32),
            ),
            grid_spec=pltpu.PrefetchScalarGridSpec(
                num_scalar_prefetch=0,
                grid=(num_m, num_v),
                in_specs=[
                    pl.BlockSpec((tm, d_model), lambda i, j: (i, 0)),
                    pl.BlockSpec((tv, d_model), lambda i, j: (j, 0)),
                ],
                out_specs=[
                    pl.BlockSpec((tm, tv), lambda i, j: (i, j)),
                    pl.BlockSpec((tm, 1), lambda i, j: (i, 0)),
                ],
                scratch_shapes=[
                    pltpu.VMEM((tm, 1), jnp.float32),
                    pltpu.VMEM((tm, 1), jnp.float32),
                ],
            ),
            compiler_params=pltpu.CompilerParams(
                dimension_semantics=("parallel", "arbitrary"),
                vmem_limit_bytes=_vmem_limit(vmem1, cap),
            ),
        )(x_in, emb_p)

        vmem2 = 2 * tm * tv * 4 + 2 * tm * 4 + 2 * tm * tv * o_item
        out = pl.pallas_call(
            _normalize_kernel,
            out_shape=jax.ShapeDtypeStruct((Mp, Vp), out_dtype),
            grid_spec=pltpu.PrefetchScalarGridSpec(
                num_scalar_prefetch=0,
                grid=(num_m, num_v),
                in_specs=[
                    pl.BlockSpec((tm, tv), lambda i, j: (i, j)),
                    pl.BlockSpec((tm, 1), lambda i, j: (i, 0)),
                ],
                out_specs=pl.BlockSpec((tm, tv), lambda i, j: (i, j)),
            ),
            compiler_params=pltpu.CompilerParams(
                dimension_semantics=("parallel", "parallel"),
                vmem_limit_bytes=_vmem_limit(vmem2, cap),
            ),
        )(logits, lse)

    out = out[:M, :vocab]
    return out.reshape(*lead, vocab)


if __name__ == "__main__":
    # Small shapes implied by the module.
    batch, seq, d_model, vocab = 2, 8, 32, 128
    key = jax.random.PRNGKey(0)
    kx, ke = jax.random.split(key)
    x = jax.random.normal(kx, (batch, seq, d_model), dtype=jnp.float32)
    emb = jax.random.normal(ke, (vocab, d_model), dtype=jnp.float32) * 0.02
    ref = jax.nn.log_softmax(jnp.matmul(x, emb.T), axis=-1)

    # 1) Single-pass path, one vocab tile, f32 output (logits stored in o_ref).
    out = jax.block_until_ready(generator_forward(x, emb))
    assert out.shape == (batch, seq, vocab)
    assert jnp.allclose(out, ref, atol=1e-5, rtol=1e-5)

    # 2) Single-pass path with 4 vocab tiles, row padding (14 -> 16) and vocab
    #    padding/masking (500 -> 512 with tv=128).
    b2, s2, v2 = 2, 7, 500
    kx2, ke2 = jax.random.split(jax.random.PRNGKey(1))
    x_b = jax.random.normal(kx2, (b2, s2, d_model), dtype=jnp.float32)
    emb_b = jax.random.normal(ke2, (v2, d_model), dtype=jnp.float32) * 0.02
    ref2 = jax.nn.log_softmax(jnp.matmul(x_b, emb_b.T), axis=-1)
    out2 = jax.block_until_ready(generator_forward(x_b, emb_b, tv_max=128))
    assert out2.shape == (b2, s2, v2)
    assert jnp.allclose(out2, ref2, atol=1e-5, rtol=1e-5)

    # 3) bf16 MXU inputs (v6e/v7x fast path); softmax math stays f32.
    out3 = jax.block_until_ready(
        generator_forward(x, emb, matmul_dtype=jnp.bfloat16))
    assert out3.shape == (batch, seq, vocab)
    assert jnp.allclose(out3, ref, atol=3e-2, rtol=0)

    # 4) bf16 output dtype exercises the separate f32 slab scratch.
    out4 = jax.block_until_ready(
        generator_forward(x_b.astype(jnp.bfloat16), emb_b.astype(jnp.bfloat16),
                          tv_max=128))
    assert out4.dtype == jnp.bfloat16
    assert jnp.allclose(out4.astype(jnp.float32), ref2, atol=7.5e-2, rtol=0)

    # 5) Two-pass fallback path (only used for extreme vocab sizes) still works.
    out5 = jax.block_until_ready(
        generator_forward(x_b, emb_b, tv_max=128, force_two_pass=True))
    assert jnp.allclose(out5, ref2, atol=1e-5, rtol=1e-5)

    print("KERNEL_OK")
</pallas_src>

<mosaic_0001>
module attributes {stable_mosaic.version = 11 : i64} {
  func.func @_stream_kernel(%arg0: i32, %arg1: i32, %arg2: memref<16x32xf32, #tpu.memory_space<vmem>>, %arg3: memref<128x32xf32, #tpu.memory_space<vmem>>, %arg4: memref<16x128xf32, #tpu.memory_space<vmem>>, %arg5: memref<16x1xf32, #tpu.memory_space<vmem>>, %arg6: memref<16x1xf32, #tpu.memory_space<vmem>>) attributes {dimension_semantics = [#tpu.dimension_semantics<parallel>, #tpu.dimension_semantics<arbitrary>], iteration_bounds = array<i64: 1, 1>, scalar_prefetch = 0 : i64, scratch_operands = 2 : i64, tpu.core_type = #tpu.core_type<tc>, window_params = [{transform_indices = @transform_0, window_bounds = array<i64: 16, 32>}, {transform_indices = @transform_1, window_bounds = array<i64: 128, 32>}, {transform_indices = @transform_2, window_bounds = array<i64: 16, 128>}]} {
    %c0_i32 = arith.constant 0 : i32
    %0 = arith.cmpi eq, %arg1, %c0_i32 : i32
    %1 = arith.extui %0 : i1 to i32
    %c0_i32_0 = arith.constant 0 : i32
    %2 = arith.cmpi ne, %1, %c0_i32_0 : i32
    scf.if %2 {
      %cst_17 = arith.constant 0xFF800000 : f32
      %29 = vector.broadcast %cst_17 : f32 to vector<16x1xf32>
      %c0_18 = arith.constant 0 : index
      %c0_19 = arith.constant 0 : index
      %30 = vector.load %arg5[%c0_18, %c0_19] : memref<16x1xf32, #tpu.memory_space<vmem>>, vector<16x1xf32>
      tpu.vector_store %arg5[%c0_18, %c0_19], %29 {strides = array<i32>} : memref<16x1xf32, #tpu.memory_space<vmem>>, vector<16x1xf32>,
      %cst_20 = arith.constant 0.000000e+00 : f32
      %31 = vector.broadcast %cst_20 : f32 to vector<16x1xf32>
      %c0_21 = arith.constant 0 : index
      %c0_22 = arith.constant 0 : index
      %32 = vector.load %arg6[%c0_21, %c0_22] : memref<16x1xf32, #tpu.memory_space<vmem>>, vector<16x1xf32>
      tpu.vector_store %arg6[%c0_21, %c0_22], %31 {strides = array<i32>} : memref<16x1xf32, #tpu.memory_space<vmem>>, vector<16x1xf32>,
    } else {
    }
    %c0 = arith.constant 0 : index
    %c0_1 = arith.constant 0 : index
    %3 = vector.load %arg2[%c0, %c0_1] : memref<16x32xf32, #tpu.memory_space<vmem>>, vector<16x32xf32>
    %c0_2 = arith.constant 0 : index
    %c0_3 = arith.constant 0 : index
    %4 = vector.load %arg3[%c0_2, %c0_3] : memref<128x32xf32, #tpu.memory_space<vmem>>, vector<128x32xf32>
    %cst = arith.constant dense<0.000000e+00> : vector<16x128xf32>
    %5 = tpu.matmul %3, %4, %cst {dimension_numbers = #tpu.dot_dimension_numbers<[1], [1], [0], [0], [0, 0, 1, 0], [], []>} : vector<16x32xf32>, vector<128x32xf32>, vector<16x128xf32> -> vector<16x128xf32>
    %c128_i32 = arith.constant 128 : i32
    %6 = arith.muli %arg1, %c128_i32 : i32
    %7 = tpu.assume_multiple %6, 128 : i32
    %c0_4 = arith.constant 0 : index
    %8 = arith.index_cast %7 : i32 to index
    %9 = vector.load %arg4[%c0_4, %8] : memref<16x128xf32, #tpu.memory_space<vmem>>, vector<16x128xf32>
    tpu.vector_store %arg4[%c0_4, %8], %5 {strides = array<i32>} : memref<16x128xf32, #tpu.memory_space<vmem>>, vector<16x128xf32>,
    %c0_5 = arith.constant 0 : index
    %c0_6 = arith.constant 0 : index
    %10 = vector.load %arg5[%c0_5, %c0_6] : memref<16x1xf32, #tpu.memory_space<vmem>>, vector<16x1xf32>
    %cst_7 = arith.constant dense<0xFF800000> : vector<16xf32>
    %11 = vector.multi_reduction <maximumf>, %5, %cst_7 [1] : vector<16x128xf32> to vector<16xf32>
    %12 = vector.shape_cast %11 : vector<16xf32> to vector<16x1xf32>
    %13 = arith.maximumf %10, %12 : vector<16x1xf32>
    %c0_8 = arith.constant 0 : index
    %c0_9 = arith.constant 0 : index
    %14 = vector.load %arg6[%c0_8, %c0_9] : memref<16x1xf32, #tpu.memory_space<vmem>>, vector<16x1xf32>
    %15 = arith.subf %10, %13 : vector<16x1xf32>
    %16 = math.exp %15 : vector<16x1xf32>
    %17 = arith.mulf %14, %16 : vector<16x1xf32>
    %18 = vector.broadcast %13 : vector<16x1xf32> to vector<16x128xf32>
    %19 = arith.subf %5, %18 : vector<16x128xf32>
    %20 = math.exp %19 : vector<16x128xf32>
    %cst_10 = arith.constant dense<0.000000e+00> : vector<16xf32>
    %21 = vector.multi_reduction <add>, %20, %cst_10 [1] : vector<16x128xf32> to vector<16xf32>
    %22 = vector.shape_cast %21 : vector<16xf32> to vector<16x1xf32>
    %23 = arith.addf %17, %22 : vector<16x1xf32>
    %c0_11 = arith.constant 0 : index
    %c0_12 = arith.constant 0 : index
    %24 = vector.load %arg6[%c0_11, %c0_12] : memref<16x1xf32, #tpu.memory_space<vmem>>, vector<16x1xf32>
    tpu.vector_store %arg6[%c0_11, %c0_12], %23 {strides = array<i32>} : memref<16x1xf32, #tpu.memory_space<vmem>>, vector<16x1xf32>,
    %c0_13 = arith.constant 0 : index
    %c0_14 = arith.constant 0 : index
    %25 = vector.load %arg5[%c0_13, %c0_14] : memref<16x1xf32, #tpu.memory_space<vmem>>, vector<16x1xf32>
    tpu.vector_store %arg5[%c0_13, %c0_14], %13 {strides = array<i32>} : memref<16x1xf32, #tpu.memory_space<vmem>>, vector<16x1xf32>,
    %c0_i32_15 = arith.constant 0 : i32
    %26 = arith.cmpi eq, %arg1, %c0_i32_15 : i32
    %27 = arith.extui %26 : i1 to i32
    %c0_i32_16 = arith.constant 0 : i32
    %28 = arith.cmpi ne, %27, %c0_i32_16 : i32
    scf.if %28 {
      %c0_17 = arith.constant 0 : index
      %c0_18 = arith.constant 0 : index
      %29 = vector.load %arg5[%c0_17, %c0_18] : memref<16x1xf32, #tpu.memory_space<vmem>>, vector<16x1xf32>
      %c0_19 = arith.constant 0 : index
      %c0_20 = arith.constant 0 : index
      %30 = vector.load %arg6[%c0_19, %c0_20] : memref<16x1xf32, #tpu.memory_space<vmem>>, vector<16x1xf32>
      %31 = math.log %30 : vector<16x1xf32>
      %32 = arith.addf %29, %31 : vector<16x1xf32>
      %c0_21 = arith.constant 0 : index
      %c0_22 = arith.constant 0 : index
      %33 = vector.load %arg4[%c0_21, %c0_22] : memref<16x128xf32, #tpu.memory_space<vmem>>, vector<16x128xf32>
      %34 = vector.broadcast %32 : vector<16x1xf32> to vector<16x128xf32>
      %35 = arith.subf %33, %34 : vector<16x128xf32>
      %c0_23 = arith.constant 0 : index
      %c0_24 = arith.constant 0 : index
      %36 = vector.load %arg4[%c0_23, %c0_24] : memref<16x128xf32, #tpu.memory_space<vmem>>, vector<16x128xf32>
      tpu.vector_store %arg4[%c0_23, %c0_24], %35 {strides = array<i32>} : memref<16x128xf32, #tpu.memory_space<vmem>>, vector<16x128xf32>,
    } else {
    }
    return
  }
  func.func @transform_0(%arg0: i32, %arg1: i32) -> (i32, i32) {
    %c0_i32 = arith.constant 0 : i32
    %c0_i32_0 = arith.constant 0 : i32
    return %arg0, %c0_i32 : i32, i32
  }
  func.func @transform_1(%arg0: i32, %arg1: i32) -> (i32, i32) {
    %c0_i32 = arith.constant 0 : i32
    %c0_i32_0 = arith.constant 0 : i32
    return %arg1, %c0_i32 : i32, i32
  }
  func.func @transform_2(%arg0: i32, %arg1: i32) -> (i32, i32) {
    %c0_i32 = arith.constant 0 : i32
    %c0_i32_0 = arith.constant 0 : i32
    return %arg0, %c0_i32 : i32, i32
  }
}

</mosaic_0001>

<llo_original>
// kernel: tpu_custom_call.1
$region0: #{tpu_custom_call.1}
  #allocation0 [shape = 'u32[]', space=smem, size = 0x4, offset = 0x4, fixed_abs, tag = 'smem constant byte address 0x4 - core index']
  #allocation1 [shape = 'u32[144,128]{1,0:T(1,128)}', space=vmem, size = 0x12000, scoped, tag = 'internal scratch']
  #allocation2 [shape = 'f32[16,1]{1,0:T(8,128)}', space=vmem, size = 0x2000, scoped, tag = 'scratch operand']
  #allocation3 [shape = 'f32[16,1]{1,0:T(8,128)}', space=vmem, size = 0x2000, scoped, tag = 'scratch operand']
  %s0 = inlined_call_operand.vmem [shape: f32[16,32], index: 0, kind: input, shape index: {}]
  %s1 = inlined_call_operand.vmem [shape: f32[128,32], index: 1, kind: input, shape index: {}]
  %s2 = inlined_call_operand.hbm [shape: f32[16,128], index: 2, kind: output, shape index: {}]
  %s3 = sld [smem:[#allocation0]]
  $region26: #{tpu_custom_call.1} parent=0
    _
  %s5 = ssub.s32 1, %s3
  %s6 = scalar_select 0, %s5, %s3
  $region1: #{tpu_custom_call.1} parent=0
    #allocation4 [shape = 'u8[8192]{0}', space=vmem, size = 0x2000, scoped, tag = 'output window, operand 0, single buffered']
    #allocation5 [shape = 's32[1]{0}', space=sflag, size = 0x4, scoped, tag = 'scoped memory for tpu_custom_call.1']
    %7 = vsyncpa [#allocation5], 0
    // Predicated region
    $region2: #{tpu_custom_call.1} parent=1 // pred_check
      _
    $region3: #{tpu_custom_call.1} parent=1 // pred_check_branch
      %9 = sbr.rel (0) target = $region5
    $region4: #{tpu_custom_call.1} parent=1 // pred_region
      _
    $region5: #{tpu_custom_call.1} parent=1 // pred_fallthru
      _
    // Predicated region
    $region6: #{tpu_custom_call.1} parent=1 // pred_check
      _
    $region7: #{tpu_custom_call.1} parent=1 // pred_check_branch
      %11 = sbr.rel (0) target = $region9
    $region8: #{tpu_custom_call.1} parent=1 // pred_region
      _
    $region9: #{tpu_custom_call.1} parent=1 // pred_fallthru
      _
    %p12 = scmp.eq.s32.totalorder 0, 0
    // Predicated region
    $region10: #{tpu_custom_call.1} parent=1 // pred_check
      %p13 = pneg %p12
    $region11: #{tpu_custom_call.1} parent=1 // pred_check_branch
      %15 = sbr.rel (%p13) target = $region13
    $region12: #{tpu_custom_call.1} parent=1 // pred_region
      %vm16 = vcmask 7168
      %17 = vst.msk [vmem:[#allocation2] sm:$0xff] %vm16, -inf
      %18 = vst.msk [vmem:[#allocation2 + $0x8] sm:$0xff] %vm16, -inf
      %19 = vst.msk [vmem:[#allocation3] sm:$0xff] %vm16, 0.0
      %20 = vst.msk [vmem:[#allocation3 + $0x8] sm:$0xff] %vm16, 0.0
    $region13: #{tpu_custom_call.1} parent=1 // pred_fallthru
      _
    %v21 = vld [vmem:[%s0] sm:$0xff]
    %v22 = vld [vmem:[%s0 + $0x8] sm:$0xff]
    %v23 = vld [vmem:[%s1] sm:$0xff]
    %v24 = vld [vmem:[%s1 + $0x8] sm:$0xff]
    %v25 = vld [vmem:[%s1 + $0x10] sm:$0xff]
    %v26 = vld [vmem:[%s1 + $0x18] sm:$0xff]
    %v27 = vld [vmem:[%s1 + $0x20] sm:$0xff]
    %v28 = vld [vmem:[%s1 + $0x28] sm:$0xff]
    %v29 = vld [vmem:[%s1 + $0x30] sm:$0xff]
    %v30 = vld [vmem:[%s1 + $0x38] sm:$0xff]
    %v31 = vld [vmem:[%s1 + $0x40] sm:$0xff]
    %v32 = vld [vmem:[%s1 + $0x48] sm:$0xff]
    %v33 = vld [vmem:[%s1 + $0x50] sm:$0xff]
    %v34 = vld [vmem:[%s1 + $0x58] sm:$0xff]
    %v35 = vld [vmem:[%s1 + $0x60] sm:$0xff]
    %v36 = vld [vmem:[%s1 + $0x68] sm:$0xff]
    %v37 = vld [vmem:[%s1 + $0x70] sm:$0xff]
    %v38 = vld [vmem:[%s1 + $0x78] sm:$0xff]
    %vm39 = vcmask 261120
    %v41 = vsel %vm39, %v21, 0
    %v44 = vsel %vm39, %v22, 0
    %v47 = vsel %vm39, %v23, 0
    %v50 = vsel %vm39, %v24, 0
    %v53 = vsel %vm39, %v25, 0
    %v56 = vsel %vm39, %v26, 0
    %v59 = vsel %vm39, %v27, 0
    %v62 = vsel %vm39, %v28, 0
    %v65 = vsel %vm39, %v29, 0
    %v68 = vsel %vm39, %v30, 0
    %v71 = vsel %vm39, %v31, 0
    %v74 = vsel %vm39, %v32, 0
    %v77 = vsel %vm39, %v33, 0
    %v80 = vsel %vm39, %v34, 0
    %v83 = vsel %vm39, %v35, 0
    %v86 = vsel %vm39, %v36, 0
    %v89 = vsel %vm39, %v37, 0
    %v92 = vsel %vm39, %v38, 0
    %94 = vmatprep.subr.mxu0 0.0
    %95 = vmatpush1.xpose.msra.mxu0 %v47
    %96 = vmatprep.subr.mxu0 0.0
    %97 = vmatpush1.xpose.msra.mxu0 %v50
    %98 = vmatprep.subr.mxu0 0.0
    %99 = vmatpush1.xpose.msra.mxu0 %v53
    %100 = vmatprep.subr.mxu0 0.0
    %101 = vmatpush1.xpose.msra.mxu0 %v56
    %102 = vmatprep.subr.mxu0 0.0
    %103 = vmatpush1.xpose.msra.mxu0 %v59
    %104 = vmatprep.subr.mxu0 0.0
    %105 = vmatpush1.xpose.msra.mxu0 %v62
    %106 = vmatprep.subr.mxu0 0.0
    %107 = vmatpush1.xpose.msra.mxu0 %v65
    %108 = vmatprep.subr.mxu0 0.0
    %109 = vmatpush1.xpose.msra.mxu0 %v68
    %110 = vmatprep.subr.mxu0 0.0
    %111 = vmatpush1.xpose.msra.mxu0 %v71
    %112 = vmatprep.subr.mxu0 0.0
    %113 = vmatpush1.xpose.msra.mxu0 %v74
    %114 = vmatprep.subr.mxu0 0.0
    %115 = vmatpush1.xpose.msra.mxu0 %v77
    %116 = vmatprep.subr.mxu0 0.0
    %117 = vmatpush1.xpose.msra.mxu0 %v80
    %118 = vmatprep.subr.mxu0 0.0
    %119 = vmatpush1.xpose.msra.mxu0 %v83
    %120 = vmatprep.subr.mxu0 0.0
    %121 = vmatpush1.xpose.msra.mxu0 %v86
    %122 = vmatprep.subr.mxu0 0.0
    %123 = vmatpush1.xpose.msra.mxu0 %v89
    %124 = vmatprep.subr.mxu0 0.0
    %125 = vmatpush1.xpose.msra.mxu0 %v92
    %126 = vmatprep.subr.mxu0 0.0
    %127 = vmatpush1.xpose.msra.mxu0 0.0
    %128 = vmatprep.subr.mxu0 0.0
    %129 = vmatpush1.xpose.msra.mxu0 0.0
    %130 = vmatprep.subr.mxu0 0.0
    %131 = vmatpush1.xpose.msra.mxu0 0.0
    %132 = vmatprep.subr.mxu0 0.0
    %133 = vmatpush1.xpose.msra.mxu0 0.0
    %134 = vmatprep.subr.mxu0 0.0
    %135 = vmatpush1.xpose.msra.mxu0 0.0
    %136 = vmatprep.subr.mxu0 0.0
    %137 = vmatpush1.xpose.msra.mxu0 0.0
    %138 = vmatprep.subr.mxu0 0.0
    %139 = vmatpush1.xpose.msra.mxu0 0.0
    %140 = vmatprep.subr.mxu0 0.0
    %141 = vmatpush1.xpose.msra.mxu0 0.0
    %142 = vmatprep.subr.mxu0 0.0
    %143 = vmatpush1.xpose.msra.mxu0 0.0
    %144 = vmatprep.subr.mxu0 0.0
    %145 = vmatpush1.xpose.msra.mxu0 0.0
    %146 = vmatprep.subr.mxu0 0.0
    %147 = vmatpush1.xpose.msra.mxu0 0.0
    %148 = vmatprep.subr.mxu0 0.0
    %149 = vmatpush1.xpose.msra.mxu0 0.0
    %150 = vmatprep.subr.mxu0 0.0
    %151 = vmatpush1.xpose.msra.mxu0 0.0
    %152 = vmatprep.subr.mxu0 0.0
    %153 = vmatpush1.xpose.msra.mxu0 0.0
    %154 = vmatprep.subr.mxu0 0.0
    %155 = vmatpush1.xpose.msra.mxu0 0.0
    %156 = vmatprep.subr.mxu0 0.0
    %157 = vmatpush1.xpose.msra.mxu0 0.0
    %158 = vmatprep.mubr.f32.mxu0 0.0
    %159 = vmatmul.mubr.f32.gmra.mrb[0].mxu0 %v41
    %v160 = vpop.f32.mrb[0].mxu0
    %v161 = vadd.f32 0.0, %v160
    %v162 = vpop.f32.mrb[0].mxu0
    %163 = vmatprep.mubr.f32.mxu0 0.0
    %164 = vmatmul.mubr.f32.gmra.mrb[0].mxu0 %v44
    %v165 = vpop.f32.mrb[0].mxu0
    %v166 = vadd.f32 0.0, %v165
    %v167 = vpop.f32.mrb[0].mxu0
    %168 = vdwg.mxu0
    %s169 = smul.u32 0, 128
    %s170 = sshra.s32 %s169, 7
    %s171 = sand.u32 %s169, 127
    %s172 = scalar_lea.vmem [#allocation4], %s170
    %173 = vst [vmem:[%s172] sm:$0xff] %v161
    %174 = vst [vmem:[%s172 + $0x8] sm:$0xff] %v166
    %v175 = vld [vmem:[#allocation2] sm:$0xff]
    %v176 = vld [vmem:[#allocation2 + $0x8] sm:$0xff]
    %177 = vmax.xlane.f32.xlu0 %v161
    %v178 = vpop.xlane.xlu0 %177
    %179 = vmax.xlane.f32.xlu0 %v166
    %v180 = vpop.xlane.xlu0 %179
    %v181 = vmax.f32 %v175, %v178
    %v182 = vmax.f32 %v176, %v180
    %v183 = vld [vmem:[#allocation3] sm:$0xff]
    %v184 = vld [vmem:[#allocation3 + $0x8] sm:$0xff]
    %v185 = vsub.f32 %v175, %v181
    %v186 = vsub.f32 %v176, %v182
    %v187 = vmul.f32 %v185, 1.442695
    %v188 = vpow.pop %v187
    %v189 = vmul.f32 %v186, 1.442695
    %v190 = vpow.pop %v189
    %v191 = vmul.f32 %v183, %v188
    %v192 = vmul.f32 %v184, %v190
    %194 = vset.pattern.permute.xlu0 0
    %195 = vperm.xlu0 %194, %v181
    %v196 = vpop.permute.xlu0 %195
    %199 = vset.pattern.permute.xlu0 0
    %200 = vperm.xlu0 %199, %v182
    %v201 = vpop.permute.xlu0 %200
    %v203 = vsub.f32 %v161, %v196
    %v204 = vsub.f32 %v166, %v201
    %v205 = vmul.f32 %v203, 1.442695
    %v206 = vpow.pop %v205
    %v207 = vmul.f32 %v204, 1.442695
    %v208 = vpow.pop %v207
    %209 = vadd.xlane.f32.xlu0 %v206
    %v210 = vpop.xlane.xlu0 %209
    %211 = vadd.xlane.f32.xlu0 %v208
    %v212 = vpop.xlane.xlu0 %211
    %v213 = vadd.f32 %v191, %v210
    %v214 = vadd.f32 %v192, %v212
    %vm215 = vcmask 7168
    %216 = vst.msk [vmem:[#allocation3] sm:$0xff] %vm215, %v213
    %217 = vst.msk [vmem:[#allocation3 + $0x8] sm:$0xff] %vm215, %v214
    %218 = vst.msk [vmem:[#allocation2] sm:$0xff] %vm215, %v181
    %219 = vst.msk [vmem:[#allocation2 + $0x8] sm:$0xff] %vm215, %v182
    // Predicated region
    $region14: #{tpu_custom_call.1} parent=1 // pred_check
      %p220 = pneg %p12
    $region15: #{tpu_custom_call.1} parent=1 // pred_check_branch
      %222 = sbr.rel (%p220) target = $region17
    $region16: #{tpu_custom_call.1} parent=1 // pred_region
      %v223 = vld [vmem:[#allocation2] sm:$0xff]
      %v224 = vld [vmem:[#allocation2 + $0x8] sm:$0xff]
      %v225 = vld [vmem:[#allocation3] sm:$0xff]
      %v226 = vld [vmem:[#allocation3 + $0x8] sm:$0xff]
      %v227 = vlog2.pop %v225
      %v228 = vmul.f32 %v227, 0.6931472
      %v229 = vlog2.pop %v226
      %v230 = vmul.f32 %v229, 0.6931472
      %v231 = vadd.f32 %v223, %v228
      %v232 = vadd.f32 %v224, %v230
      %v233 = vld [vmem:[#allocation4] sm:$0xff]
      %v234 = vld [vmem:[#allocation4 + $0x8] sm:$0xff]
      %236 = vset.pattern.permute.xlu0 0
      %237 = vperm.xlu0 %236, %v231
      %v238 = vpop.permute.xlu0 %237
      %241 = vset.pattern.permute.xlu0 0
      %242 = vperm.xlu0 %241, %v232
      %v243 = vpop.permute.xlu0 %242
      %v245 = vsub.f32 %v233, %v238
      %v246 = vsub.f32 %v234, %v243
      %247 = vst [vmem:[#allocation4] sm:$0xff] %v245
      %248 = vst [vmem:[#allocation4 + $0x8] sm:$0xff] %v246
    $region17: #{tpu_custom_call.1} parent=1 // pred_fallthru
      _
    // Predicated region
    $region18: #{tpu_custom_call.1} parent=1 // pred_check
      _
    $region19: #{tpu_custom_call.1} parent=1 // pred_check_branch
      %250 = sbr.rel (0) target = $region21
    $region20: #{tpu_custom_call.1} parent=1 // pred_region
      %s252 = ssub.s32 256, 256
      %253 = vsyncadd [#allocation5], %s252
      %s254 = sshll.u32 [#allocation4], 4
      %s255 = int_to_ptr.vmem [resolvable:$true] %s254
      %260 = dma.vmem_to_hbm [thread:$0]  %s255, 256, %s2, [#allocation5], 128, 128, 8
    $region21: #{tpu_custom_call.1} parent=1 // pred_fallthru
      _
    // Predicated region
    $region22: #{tpu_custom_call.1} parent=1 // pred_check
      _
    $region23: #{tpu_custom_call.1} parent=1 // pred_check_branch
      %262 = sbr.rel (0) target = $region25
    $region24: #{tpu_custom_call.1} parent=1 // pred_region
      %263 = dma.done [#allocation5], 256
    $region25: #{tpu_custom_call.1} parent=1 // pred_fallthru
      _
    %264 = vsyncpa [#allocation5], 1

</llo_original>
